<compile_context>
chip_gen: v5e
topology: v5e:2x2
jax: 0.10.0
libtpu: 0.0.40
codegen_flags: <defaults>
</compile_context>

<pallas_src>
import functools
import math

import jax
import jax.numpy as jnp
from jax.experimental import pallas as pl
from jax.experimental.pallas import tpu as pltpu

EPS = 1e-5
_LANES = 128


def _cdiv(a, b):
    return -(-a // b)


def _round_up(x, m):
    return _cdiv(x, m) * m


def _vmem_limit_bytes():
    """Generation-aware scoped-VMEM limit (v7x: 64 MiB/TC; v5e/v6e: 128 MiB)."""
    try:
        cap = int(pltpu.get_tpu_info().vmem_capacity_bytes)
    except Exception:
        cap = 64 * 1024 * 1024            # conservative (v7x-sized) fallback
    return int(min(cap * 3 // 4, 96 * 1024 * 1024))


def _pack_target_lanes():
    """Lane-pack width for the small-C path: 256 on 256-wide-MXU gens (v6e/v7x)."""
    try:
        kind = jax.devices()[0].device_kind.lower()
    except Exception:
        return 128
    if any(v in kind for v in ("v2", "v3", "v4", "v5")):
        return 128
    return 256


# --------------------------------------------------------------------------- #
# Kernels
# --------------------------------------------------------------------------- #
def _prenorm_packed_kernel(x_ref, m_ref, g_ref, b_ref, w_ref, fb_ref, o_ref, *,
                           stats_precision):
    """Small-C NHWC path: G channel-groups packed along the 128/256-lane axis.

    x_ref : (TILE, L=G*C)  lane l = (packed row offset)*C + channel
    m_ref : (L, L) f32     block-diag segment-mean matrix kron(I_G, 1/C)
    w_ref : (L, L) bf16    block-diag 1x1-conv weight kron(I_G, W)
    g/b/fb: (1, L) f32     per-channel params tiled G times
    """
    x = x_ref[...].astype(jnp.float32)
    m = m_ref[...]
    # Segment mean / var via block-diagonal matmuls: stays lane-dense and uses
    # the otherwise idle MXU instead of cross-lane XLU reductions.  At DEFAULT
    # precision the MXU truncates x / cen^2 to bf16; precise_stats=True runs
    # these two dots at Precision.HIGHEST (free under the HBM roofline on
    # v6e/v7x; may start to bind on v5e -- explicit, deliberate choice).
    mean = jnp.dot(x, m, preferred_element_type=jnp.float32,
                   precision=stats_precision)
    cen = x - mean
    var = jnp.dot(cen * cen, m, preferred_element_type=jnp.float32,
                  precision=stats_precision)
    # PyTorch semantics: (x - mean) / (sqrt(var) + eps)  -- eps added to std.
    inv = pl.reciprocal(jnp.sqrt(var) + EPS, approx=True)
    xn = cen * inv * g_ref[...] + b_ref[...]
    # fn: pointwise (1x1 conv) projection -> bf16 MXU matmul, f32 accumulation.
    y = jnp.dot(xn.astype(jnp.bfloat16), w_ref[...],
                preferred_element_type=jnp.float32) + fb_ref[...]
    o_ref[...] = y.astype(o_ref.dtype)


def _prenorm_wide_kernel(x_ref, g_ref, b_ref, w_ref, fb_ref, o_ref):
    """C >= 128 NHWC path: channels already lane-dense, direct row reductions."""
    x = x_ref[...].astype(jnp.float32)
    mean = jnp.mean(x, axis=-1, keepdims=True)
    cen = x - mean
    var = jnp.mean(cen * cen, axis=-1, keepdims=True)
    inv = pl.reciprocal(jnp.sqrt(var) + EPS, approx=True)
    xn = cen * inv * g_ref[...] + b_ref[...]
    # TODO(synk): for very large C (>= ~2048) on v7x, tile fn_w over output
    # channels with an extra grid axis instead of keeping the full (C, C)
    # bf16 weight resident in VMEM.
    y = jnp.dot(xn.astype(jnp.bfloat16), w_ref[...],
                preferred_element_type=jnp.float32) + fb_ref[...]
    o_ref[...] = y.astype(o_ref.dtype)


def _prenorm_nchw_kernel(x_ref, g_ref, b_ref, wt_ref, fb_ref, o_ref, *, unroll_c):
    """Native NCHW path: channels on sublanes, spatial (H*W) chunk on lanes.

    x_ref : (1, C, TS)   g/b/fb : (C, 1) f32   wt : (C_out, C_in) f32|bf16
    """
    x = x_ref[0].astype(jnp.float32)                     # (C, TS)
    C = x.shape[0]
    if unroll_c:
        # Tiny C: explicit VPU adds (no cross-sublane reduce, no tiny matmul).
        s = x[0:1, :]
        for c in range(1, C):
            s = s + x[c:c + 1, :]
        mean = s * (1.0 / C)
        cen = x - mean
        sq = cen * cen
        v = sq[0:1, :]
        for c in range(1, C):
            v = v + sq[c:c + 1, :]
        var = v * (1.0 / C)
    else:
        mean = jnp.mean(x, axis=0, keepdims=True)        # (1, TS)
        cen = x - mean
        var = jnp.mean(cen * cen, axis=0, keepdims=True)
    inv = pl.reciprocal(jnp.sqrt(var) + EPS, approx=True)
    xn = cen * inv * g_ref[...] + b_ref[...]             # (C, TS)
    if unroll_c:
        wt = wt_ref[...]                                 # (C, C) f32
        acc = wt[:, 0:1] * xn[0:1, :]
        for c in range(1, C):
            acc = acc + wt[:, c:c + 1] * xn[c:c + 1, :]
        y = acc + fb_ref[...]
    else:
        y = jnp.dot(wt_ref[...], xn.astype(jnp.bfloat16),
                    preferred_element_type=jnp.float32) + fb_ref[...]
    o_ref[0] = y.astype(o_ref.dtype)


# --------------------------------------------------------------------------- #
# Wrappers
# --------------------------------------------------------------------------- #
@functools.partial(jax.jit, static_argnames=("tile_rows", "precise_stats"))
def prenorm_pallas_nhwc(x_nhwc, g, b, fn_w, fn_b, *, tile_rows=1024,
                        precise_stats=False):
    """PreNorm with fn = pointwise channel projection, channels-last input.

    x_nhwc: (N, H, W, C); g, b, fn_b: (C,); fn_w: (C, C) with
    out[..., o] = sum_c norm(x)[..., c] * fn_w[c, o] + fn_b[o].
    I/O stays in x_nhwc.dtype (bf16 in -> bf16 out); stats are f32 in-kernel.
    """
    N, H, W, C = x_nhwc.shape
    rows = N * H * W
    out_dtype = x_nhwc.dtype
    in_b = x_nhwc.dtype.itemsize
    f32 = jnp.float32

    # Lane packing: keep L a multiple of 128 (unmasked vst, full MXU columns).
    pack = _pack_target_lanes()
    if C >= _LANES:
        G = 1
    elif pack % C == 0:
        G = pack // C
    elif _LANES % C == 0:
        G = _LANES // C
    else:
        l = (C * _LANES) // math.gcd(C, _LANES)
        G = l // C if l <= 4 * _LANES else max(1, _LANES // C)
    L = G * C

    x2d = x_nhwc.reshape(rows, C)
    # Pad only to a multiple of G (no-op whenever rows % G == 0); ragged row
    # tiles are handled by Pallas-masked last blocks, not by padding to tiles.
    pad = (-rows) % G
    if pad:
        x2d = jnp.pad(x2d, ((0, pad), (0, 0)))
    R = (rows + pad) // G
    xp = x2d.reshape(R, L)

    # Row tile under an honest, generation-aware VMEM budget:
    # 2 in + 2 out pipeline buffers plus ~6 f32 temporaries, plus resident consts.
    vmem_limit = _vmem_limit_bytes()
    budget = vmem_limit // 2
    const_bytes = (L * L * 4 + L * L * 2 + 3 * L * 4) if G > 1 else (L * L * 2 + 3 * L * 4)
    bytes_per_row = L * (2 * in_b + 2 * in_b + 6 * 4)
    tile = min(int(tile_rows), max(8, (budget - const_bytes) // bytes_per_row))
    tile = max(8, (tile // 8) * 8)
    tile = min(tile, _round_up(R, 8))
    if R >= 16 and _cdiv(R, tile) < 2:
        tile = max(8, _round_up(_cdiv(R, 2), 8))   # >= 2 grid steps for v7x's 2 TCs
    grid = (_cdiv(R, tile),)

    # Grid-invariant operands (resident, single-buffered).
    g_t = jnp.tile(g.astype(f32).reshape(1, C), (1, G))
    b_t = jnp.tile(b.astype(f32).reshape(1, C), (1, G))
    fb_t = jnp.tile(fn_b.astype(f32).reshape(1, C), (1, G))
    w_big = jnp.kron(jnp.eye(G, dtype=f32), fn_w.astype(f32)).astype(jnp.bfloat16)

    def _const_spec(shape):
        zeros = (0,) * len(shape)
        return pl.BlockSpec(shape, lambda i, _z=zeros: _z,
                            pipeline_mode=pl.Buffered(1))

    row_spec = pl.BlockSpec((tile, L), lambda i: (i, 0))
    stats_precision = jax.lax.Precision.HIGHEST if precise_stats else None

    if G > 1:
        m_seg = jnp.kron(jnp.eye(G, dtype=f32), jnp.full((C, C), 1.0 / C, f32))
        kernel = functools.partial(_prenorm_packed_kernel,
                                   stats_precision=stats_precision)
        args = (xp, m_seg, g_t, b_t, w_big, fb_t)
        in_specs = [row_spec, _const_spec((L, L)), _const_spec((1, L)),
                    _const_spec((1, L)), _const_spec((L, L)), _const_spec((1, L))]
        n_mm = 3
    else:
        kernel = _prenorm_wide_kernel
        args = (xp, g_t, b_t, w_big, fb_t)
        in_specs = [row_spec, _const_spec((1, L)), _const_spec((1, L)),
                    _const_spec((L, L)), _const_spec((1, L))]
        n_mm = 1

    cost = pl.CostEstimate(
        flops=int(2 * R * L * L * n_mm + 10 * R * L),
        transcendentals=int(2 * R * L),
        bytes_accessed=int(2 * R * L * in_b + 2 * const_bytes),
    )

    out = pl.pallas_call(
        kernel,
        out_shape=jax.ShapeDtypeStruct((R, L), out_dtype),
        grid_spec=pltpu.PrefetchScalarGridSpec(
            num_scalar_prefetch=0,
            grid=grid,
            in_specs=in_specs,
            out_specs=pl.BlockSpec((tile, L), lambda i: (i, 0)),
        ),
        compiler_params=pltpu.CompilerParams(
            dimension_semantics=("parallel",),
            vmem_limit_bytes=vmem_limit,
        ),
        cost_estimate=cost,
    )(*args)

    y2d = out.reshape(R * G, C)
    if pad:
        y2d = y2d[:rows]
    return y2d.reshape(N, H, W, C)


@functools.partial(jax.jit, static_argnames=("tile_cols",))
def prenorm_pallas(x_nchw, g, b, fn_w, fn_b, *, tile_cols=2048):
    """PreNorm on NCHW input (the PyTorch interface), native layout.

    Channels stay on the sublane axis and a chunk of H*W sits on lanes, so no
    NCHW<->NHWC transpose HBM passes are needed.  For C <= 16 the 1x1-conv fn
    is unrolled on the VPU; for larger C it is a bf16 MXU matmul (f32 accum).
    """
    N, C, H, W = x_nchw.shape
    S = H * W
    out_dtype = x_nchw.dtype
    in_b = x_nchw.dtype.itemsize
    f32 = jnp.float32
    x3 = x_nchw.reshape(N, C, S)

    unroll_c = C <= 16
    wt = jnp.transpose(fn_w.astype(f32), (1, 0))         # (C_out, C_in)
    if not unroll_c:
        wt = wt.astype(jnp.bfloat16)
    g_c = g.astype(f32).reshape(C, 1)
    b_c = b.astype(f32).reshape(C, 1)
    fb_c = fn_b.astype(f32).reshape(C, 1)

    vmem_limit = _vmem_limit_bytes()
    budget = vmem_limit // 2
    c_eff = max(C, 8)                                    # sublane padding of tiles
    const_bytes = C * C * (4 if unroll_c else 2) + 3 * C * 4
    bytes_per_col = c_eff * (2 * in_b + 2 * in_b + 6 * 4)
    if S <= 128:
        ts = S                                           # block == full spatial dim
    else:
        ts = min(int(tile_cols),
                 max(128, (budget - const_bytes) // bytes_per_col), S)
        ts = max(128, (ts // 128) * 128)
        if N * _cdiv(S, ts) < 2 and S >= 256:
            ts = max(128, _round_up(_cdiv(S, 2), 128))   # keep >= 2 grid steps (v7x)
    grid = (N, _cdiv(S, ts))

    def _const_spec(shape):
        zeros = (0,) * len(shape)
        return pl.BlockSpec(shape, lambda n, s, _z=zeros: _z,
                            pipeline_mode=pl.Buffered(1))

    kernel = functools.partial(_prenorm_nchw_kernel, unroll_c=unroll_c)

    cost = pl.CostEstimate(
        flops=int(N * S * (2 * C * C + 10 * C)),
        transcendentals=int(2 * N * S),
        bytes_accessed=int(2 * N * C * S * in_b + 2 * const_bytes),
    )

    out = pl.pallas_call(
        kernel,
        out_shape=jax.ShapeDtypeStruct((N, C, S), out_dtype),
        grid_spec=pltpu.PrefetchScalarGridSpec(
            num_scalar_prefetch=0,
            grid=grid,
            in_specs=[pl.BlockSpec((1, C, ts), lambda n, s: (n, 0, s)),
                      _const_spec((C, 1)), _const_spec((C, 1)),
                      _const_spec((C, C)), _const_spec((C, 1))],
            out_specs=pl.BlockSpec((1, C, ts), lambda n, s: (n, 0, s)),
        ),
        compiler_params=pltpu.CompilerParams(
            dimension_semantics=("parallel", "parallel"),
            vmem_limit_bytes=vmem_limit,
        ),
        cost_estimate=cost,
    )(x3, g_c, b_c, wt, fb_c)

    return out.reshape(N, C, H, W)


# --------------------------------------------------------------------------- #
# Pure-JAX references (f32, PyTorch semantics: eps added to std)
# --------------------------------------------------------------------------- #
def prenorm_reference_nchw(x, g, b, fn_w, fn_b):
    x = x.astype(jnp.float32)
    mean = jnp.mean(x, axis=1, keepdims=True)
    var = jnp.mean((x - mean) ** 2, axis=1, keepdims=True)
    xn = (x - mean) / (jnp.sqrt(var) + EPS) * g.reshape(1, -1, 1, 1) + b.reshape(1, -1, 1, 1)
    y = jnp.einsum("nchw,co->nohw", xn, fn_w.astype(jnp.float32))
    return y + fn_b.reshape(1, -1, 1, 1)


def prenorm_reference_nhwc(x, g, b, fn_w, fn_b):
    x = x.astype(jnp.float32)
    mean = jnp.mean(x, axis=-1, keepdims=True)
    var = jnp.mean((x - mean) ** 2, axis=-1, keepdims=True)
    xn = (x - mean) / (jnp.sqrt(var) + EPS) * g + b
    return jnp.einsum("nhwc,co->nhwo", xn, fn_w.astype(jnp.float32)) + fn_b


# --------------------------------------------------------------------------- #
if __name__ == "__main__":
    key = jax.random.PRNGKey(0)

    def make_params(k, C):
        kg, kb, kw, kfb = jax.random.split(k, 4)
        g = 1.0 + 0.1 * jax.random.normal(kg, (C,), dtype=jnp.float32)
        b = 0.1 * jax.random.normal(kb, (C,), dtype=jnp.float32)
        fn_w = 0.1 * jax.random.normal(kw, (C, C), dtype=jnp.float32)
        fn_b = 0.1 * jax.random.normal(kfb, (C,), dtype=jnp.float32)
        return g, b, fn_w, fn_b

    def check(out, ref, tol, tag):
        err = float(jnp.max(jnp.abs(out.astype(jnp.float32) - ref)))
        assert err < tol, f"{tag}: max abs err {err} >= {tol}"

    ks = jax.random.split(key, 8)

    # 1) NCHW (PyTorch interface), small C -> native NCHW kernel, unrolled conv.
    g, b, fw, fb = make_params(ks[0], 4)
    x = jax.random.normal(ks[1], (2, 4, 16, 16), dtype=jnp.float32)
    out = jax.block_until_ready(prenorm_pallas(x, g, b, fw, fb))
    assert out.shape == (2, 4, 16, 16)
    check(out, prenorm_reference_nchw(x, g, b, fw, fb), 5e-2, "nchw C=4")

    # 2) NCHW, C=128 -> native NCHW kernel, MXU conv over sublane contraction.
    g, b, fw, fb = make_params(ks[2], 128)
    x = jax.random.normal(ks[3], (2, 128, 16, 16), dtype=jnp.float32)
    out = jax.block_until_ready(prenorm_pallas(x, g, b, fw, fb))
    check(out, prenorm_reference_nchw(x, g, b, fw, fb), 5e-2, "nchw C=128")

    # 3) NHWC (preferred model-level layout), small C -> lane-packed kernel.
    g, b, fw, fb = make_params(ks[4], 4)
    x = jax.random.normal(ks[5], (2, 16, 16, 4), dtype=jnp.float32)
    out = jax.block_until_ready(prenorm_pallas_nhwc(x, g, b, fw, fb))
    check(out, prenorm_reference_nhwc(x, g, b, fw, fb), 5e-2, "nhwc C=4")

    # 3b) Same in bf16 I/O (half the HBM bytes; output stays bf16).
    xb = x.astype(jnp.bfloat16)
    outb = jax.block_until_ready(prenorm_pallas_nhwc(xb, g, b, fw, fb))
    assert outb.dtype == jnp.bfloat16
    check(outb, prenorm_reference_nhwc(xb, g, b, fw, fb), 1e-1, "nhwc C=4 bf16")

    # 4) NHWC, C=128 -> wide (lane-dense channels) kernel.
    g, b, fw, fb = make_params(ks[6], 128)
    x = jax.random.normal(ks[7], (2, 8, 8, 128), dtype=jnp.float32)
    out = jax.block_until_ready(prenorm_pallas_nhwc(x, g, b, fw, fb))
    check(out, prenorm_reference_nhwc(x, g, b, fw, fb), 5e-2, "nhwc C=128")

    print("KERNEL_OK")
</pallas_src>

<mosaic_0001>
module attributes {stable_mosaic.version = 11 : i64} {
  func.func @_prenorm_nchw_kernel(%arg0: i32, %arg1: i32, %arg2: memref<1x4x256xf32, #tpu.memory_space<vmem>>, %arg3: memref<4x1xf32, #tpu.memory_space<vmem>>, %arg4: memref<4x1xf32, #tpu.memory_space<vmem>>, %arg5: memref<4x4xf32, #tpu.memory_space<vmem>>, %arg6: memref<4x1xf32, #tpu.memory_space<vmem>>, %arg7: memref<1x4x256xf32, #tpu.memory_space<vmem>>) attributes {dimension_semantics = [#tpu.dimension_semantics<parallel>, #tpu.dimension_semantics<parallel>], iteration_bounds = array<i64: 2, 1>, scalar_prefetch = 0 : i64, scratch_operands = 0 : i64, tpu.core_type = #tpu.core_type<tc>, window_params = [{transform_indices = @transform_0, window_bounds = array<i64: 1, 4, 256>}, {pipeline_mode = #tpu.pipeline_mode<synchronous>, transform_indices = @transform_1, window_bounds = array<i64: 4, 1>}, {pipeline_mode = #tpu.pipeline_mode<synchronous>, transform_indices = @transform_2, window_bounds = array<i64: 4, 1>}, {pipeline_mode = #tpu.pipeline_mode<synchronous>, transform_indices = @transform_3, window_bounds = array<i64: 4, 4>}, {pipeline_mode = #tpu.pipeline_mode<synchronous>, transform_indices = @transform_4, window_bounds = array<i64: 4, 1>}, {transform_indices = @transform_5, window_bounds = array<i64: 1, 4, 256>}]} {
    %c0 = arith.constant 0 : index
    %c0_0 = arith.constant 0 : index
    %c0_1 = arith.constant 0 : index
    %0 = vector.load %arg2[%c0, %c0_0, %c0_1] : memref<1x4x256xf32, #tpu.memory_space<vmem>>, vector<1x4x256xf32>
    %1 = vector.shape_cast %0 : vector<1x4x256xf32> to vector<4x256xf32>
    %2 = vector.extract_strided_slice %1 {offsets = [0, 0], sizes = [1, 256], strides = [1, 1]} : vector<4x256xf32> to vector<1x256xf32>
    %3 = vector.extract_strided_slice %1 {offsets = [1, 0], sizes = [1, 256], strides = [1, 1]} : vector<4x256xf32> to vector<1x256xf32>
    %4 = arith.addf %2, %3 : vector<1x256xf32>
    %5 = vector.extract_strided_slice %1 {offsets = [2, 0], sizes = [1, 256], strides = [1, 1]} : vector<4x256xf32> to vector<1x256xf32>
    %6 = arith.addf %4, %5 : vector<1x256xf32>
    %7 = vector.extract_strided_slice %1 {offsets = [3, 0], sizes = [1, 256], strides = [1, 1]} : vector<4x256xf32> to vector<1x256xf32>
    %8 = arith.addf %6, %7 : vector<1x256xf32>
    %cst = arith.constant 2.500000e-01 : f32
    %9 = vector.broadcast %cst : f32 to vector<1x256xf32>
    %10 = arith.mulf %8, %9 : vector<1x256xf32>
    %11 = vector.broadcast %10 : vector<1x256xf32> to vector<4x256xf32>
    %12 = arith.subf %1, %11 : vector<4x256xf32>
    %13 = arith.mulf %12, %12 : vector<4x256xf32>
    %14 = vector.extract_strided_slice %13 {offsets = [0, 0], sizes = [1, 256], strides = [1, 1]} : vector<4x256xf32> to vector<1x256xf32>
    %15 = vector.extract_strided_slice %13 {offsets = [1, 0], sizes = [1, 256], strides = [1, 1]} : vector<4x256xf32> to vector<1x256xf32>
    %16 = arith.addf %14, %15 : vector<1x256xf32>
    %17 = vector.extract_strided_slice %13 {offsets = [2, 0], sizes = [1, 256], strides = [1, 1]} : vector<4x256xf32> to vector<1x256xf32>
    %18 = arith.addf %16, %17 : vector<1x256xf32>
    %19 = vector.extract_strided_slice %13 {offsets = [3, 0], sizes = [1, 256], strides = [1, 1]} : vector<4x256xf32> to vector<1x256xf32>
    %20 = arith.addf %18, %19 : vector<1x256xf32>
    %cst_2 = arith.constant 2.500000e-01 : f32
    %21 = vector.broadcast %cst_2 : f32 to vector<1x256xf32>
    %22 = arith.mulf %20, %21 : vector<1x256xf32>
    %23 = math.sqrt %22 : vector<1x256xf32>
    %cst_3 = arith.constant 9.99999974E-6 : f32
    %24 = vector.broadcast %cst_3 : f32 to vector<1x256xf32>
    %25 = arith.addf %23, %24 : vector<1x256xf32>
    %26 = tpu.reciprocal %25 {approx = true} : vector<1x256xf32> -> vector<1x256xf32>
    %27 = vector.broadcast %26 : vector<1x256xf32> to vector<4x256xf32>
    %28 = arith.mulf %12, %27 : vector<4x256xf32>
    %c0_4 = arith.constant 0 : index
    %c0_5 = arith.constant 0 : index
    %29 = vector.load %arg3[%c0_4, %c0_5] : memref<4x1xf32, #tpu.memory_space<vmem>>, vector<4x1xf32>
    %30 = vector.broadcast %29 : vector<4x1xf32> to vector<4x256xf32>
    %31 = arith.mulf %28, %30 : vector<4x256xf32>
    %c0_6 = arith.constant 0 : index
    %c0_7 = arith.constant 0 : index
    %32 = vector.load %arg4[%c0_6, %c0_7] : memref<4x1xf32, #tpu.memory_space<vmem>>, vector<4x1xf32>
    %33 = vector.broadcast %32 : vector<4x1xf32> to vector<4x256xf32>
    %34 = arith.addf %31, %33 : vector<4x256xf32>
    %c0_8 = arith.constant 0 : index
    %c0_9 = arith.constant 0 : index
    %35 = vector.load %arg5[%c0_8, %c0_9] : memref<4x4xf32, #tpu.memory_space<vmem>>, vector<4x4xf32>
    %36 = vector.extract_strided_slice %35 {offsets = [0, 0], sizes = [4, 1], strides = [1, 1]} : vector<4x4xf32> to vector<4x1xf32>
    %37 = vector.extract_strided_slice %34 {offsets = [0, 0], sizes = [1, 256], strides = [1, 1]} : vector<4x256xf32> to vector<1x256xf32>
    %38 = vector.broadcast %36 : vector<4x1xf32> to vector<4x256xf32>
    %39 = vector.broadcast %37 : vector<1x256xf32> to vector<4x256xf32>
    %40 = arith.mulf %38, %39 : vector<4x256xf32>
    %41 = vector.extract_strided_slice %35 {offsets = [0, 1], sizes = [4, 1], strides = [1, 1]} : vector<4x4xf32> to vector<4x1xf32>
    %42 = vector.extract_strided_slice %34 {offsets = [1, 0], sizes = [1, 256], strides = [1, 1]} : vector<4x256xf32> to vector<1x256xf32>
    %43 = vector.broadcast %41 : vector<4x1xf32> to vector<4x256xf32>
    %44 = vector.broadcast %42 : vector<1x256xf32> to vector<4x256xf32>
    %45 = arith.mulf %43, %44 : vector<4x256xf32>
    %46 = arith.addf %40, %45 : vector<4x256xf32>
    %47 = vector.extract_strided_slice %35 {offsets = [0, 2], sizes = [4, 1], strides = [1, 1]} : vector<4x4xf32> to vector<4x1xf32>
    %48 = vector.extract_strided_slice %34 {offsets = [2, 0], sizes = [1, 256], strides = [1, 1]} : vector<4x256xf32> to vector<1x256xf32>
    %49 = vector.broadcast %47 : vector<4x1xf32> to vector<4x256xf32>
    %50 = vector.broadcast %48 : vector<1x256xf32> to vector<4x256xf32>
    %51 = arith.mulf %49, %50 : vector<4x256xf32>
    %52 = arith.addf %46, %51 : vector<4x256xf32>
    %53 = vector.extract_strided_slice %35 {offsets = [0, 3], sizes = [4, 1], strides = [1, 1]} : vector<4x4xf32> to vector<4x1xf32>
    %54 = vector.extract_strided_slice %34 {offsets = [3, 0], sizes = [1, 256], strides = [1, 1]} : vector<4x256xf32> to vector<1x256xf32>
    %55 = vector.broadcast %53 : vector<4x1xf32> to vector<4x256xf32>
    %56 = vector.broadcast %54 : vector<1x256xf32> to vector<4x256xf32>
    %57 = arith.mulf %55, %56 : vector<4x256xf32>
    %58 = arith.addf %52, %57 : vector<4x256xf32>
    %c0_10 = arith.constant 0 : index
    %c0_11 = arith.constant 0 : index
    %59 = vector.load %arg6[%c0_10, %c0_11] : memref<4x1xf32, #tpu.memory_space<vmem>>, vector<4x1xf32>
    %60 = vector.broadcast %59 : vector<4x1xf32> to vector<4x256xf32>
    %61 = arith.addf %58, %60 : vector<4x256xf32>
    %c0_12 = arith.constant 0 : index
    %c0_13 = arith.constant 0 : index
    %c0_14 = arith.constant 0 : index
    %62 = vector.load %arg7[%c0_12, %c0_13, %c0_14] : memref<1x4x256xf32, #tpu.memory_space<vmem>>, vector<1x4x256xf32>
    %63 = vector.shape_cast %62 : vector<1x4x256xf32> to vector<4x256xf32>
    %64 = vector.shape_cast %61 : vector<4x256xf32> to vector<1x4x256xf32>
    tpu.vector_store %arg7[%c0_12, %c0_13, %c0_14], %64 {strides = array<i32>} : memref<1x4x256xf32, #tpu.memory_space<vmem>>, vector<1x4x256xf32>,
    return
  }
  func.func @transform_0(%arg0: i32, %arg1: i32) -> (i32, i32, i32) {
    %c0_i32 = arith.constant 0 : i32
    %c0_i32_0 = arith.constant 0 : i32
    return %arg0, %c0_i32, %arg1 : i32, i32, i32
  }
  func.func @transform_1(%arg0: i32, %arg1: i32) -> (i32, i32) {
    %c0_i32 = arith.constant 0 : i32
    %c0_i32_0 = arith.constant 0 : i32
    %c0_i32_1 = arith.constant 0 : i32
    return %c0_i32, %c0_i32_0 : i32, i32
  }
  func.func @transform_2(%arg0: i32, %arg1: i32) -> (i32, i32) {
    %c0_i32 = arith.constant 0 : i32
    %c0_i32_0 = arith.constant 0 : i32
    %c0_i32_1 = arith.constant 0 : i32
    return %c0_i32, %c0_i32_0 : i32, i32
  }
  func.func @transform_3(%arg0: i32, %arg1: i32) -> (i32, i32) {
    %c0_i32 = arith.constant 0 : i32
    %c0_i32_0 = arith.constant 0 : i32
    %c0_i32_1 = arith.constant 0 : i32
    return %c0_i32, %c0_i32_0 : i32, i32
  }
  func.func @transform_4(%arg0: i32, %arg1: i32) -> (i32, i32) {
    %c0_i32 = arith.constant 0 : i32
    %c0_i32_0 = arith.constant 0 : i32
    %c0_i32_1 = arith.constant 0 : i32
    return %c0_i32, %c0_i32_0 : i32, i32
  }
  func.func @transform_5(%arg0: i32, %arg1: i32) -> (i32, i32, i32) {
    %c0_i32 = arith.constant 0 : i32
    %c0_i32_0 = arith.constant 0 : i32
    return %arg0, %c0_i32, %arg1 : i32, i32, i32
  }
}

</mosaic_0001>

<llo_original>
// kernel: prenorm_pallas.1
$region0: #{prenorm_pallas.1}
  #allocation0 [shape = 'u32[]', space=smem, size = 0x4, offset = 0x4, fixed_abs, tag = 'smem constant byte address 0x4 - core index']
  #allocation1 [shape = 'u32[72,128]{1,0:T(1,128)}', space=vmem, size = 0x9000, scoped, tag = 'internal scratch']
  %s0 = inlined_call_operand.vmem [shape: f32[2,4,256], index: 0, kind: input, shape index: {}]
  %s1 = inlined_call_operand.vmem [shape: f32[4,1], index: 1, kind: input, shape index: {}]
  %s2 = inlined_call_operand.vmem [shape: f32[4,1], index: 2, kind: input, shape index: {}]
  %s3 = inlined_call_operand.vmem [shape: f32[4,4], index: 3, kind: input, shape index: {}]
  %s4 = inlined_call_operand.vmem [shape: f32[4,1], index: 4, kind: input, shape index: {}]
  %s5 = inlined_call_operand.vmem [shape: f32[2,4,256], index: 5, kind: output, shape index: {}]
  %s6 = sld [smem:[#allocation0]]
  $region53: #{prenorm_pallas.1} parent=0
    _
  %s8 = ssub.s32 1, %s6
  %s9 = scalar_select 0, %s8, %s6
  loop: start=0, step=1, limit=4
  $region2: #{prenorm_pallas.1} parent=0 // loop_pre_header
    _
  $region3: #{prenorm_pallas.1} parent=0 // loop_header
    %s11 = sphi 0, %s15
    %p12 = scmp.ge.s32.totalorder %s11, 4
    %s18 = sphi 0, %s30
    %s19 = sphi 0, %s26
    %s20 = sphi 0, %s18
    %s21 = sphi 0, %s19
    %s22 = sphi 0, %s20
    %s23 = sphi 0, %s21
    %s35 = sphi 0, %s37
    %s38 = sphi 0, %s35
    %s39 = sphi 0, %s38
    %s55 = sphi 0, %s39
    %s59 = sphi 0, %s59
    %s61 = sphi 0, %s59
    %s62 = sphi 0, %s61
    %s76 = sphi 0, %s62
    %s80 = sphi 0, %s80
    %s82 = sphi 0, %s80
    %s83 = sphi 0, %s82
    %s97 = sphi 0, %s83
    %s101 = sphi 0, %s101
    %s103 = sphi 0, %s101
    %s104 = sphi 0, %s103
    %s118 = sphi 0, %s104
    %s122 = sphi 0, %s122
    %s124 = sphi 0, %s122
    %s125 = sphi 0, %s124
    %s139 = sphi 0, %s125
    %s147 = sphi 0, %s149
    %s150 = sphi 0, %s147
    %s151 = sphi 0, %s150
    %s167 = sphi 0, %s151
  $region4: #{prenorm_pallas.1} parent=0 // loop_header_branch
    %14 = sbr.rel (%p12) target = $region8
  $region5: #{prenorm_pallas.1} parent=0 // loop_body
    %s16 = ssub.s32 %s11, 1
    %s17 = ssub.s32 %s11, 2
    %s24 = sadd.s32 1, %s19
    %p25 = scmp.ge.s32.totalorder %s24, 1
    %s26 = scalar_select %p25, 0, %s24
    %s27 = sadd.s32 1, %s18
    %s28 = scalar_select %p25, %s27, %s18
    %p29 = scmp.ge.s32.totalorder %s28, 2
    %s30 = scalar_select %p29, 0, %s28
    %s31 = ssub.s32 %s18, %s30
    %s32 = ssub.s32 %s19, %s26
    %s33 = sor.u32 %s31, %s32
    %p34 = scmp.eq.s32.totalorder %s33, 0
    %s36 = sadd.s32 %s35, 1
    %s37 = scalar_select %p34, %s35, %s36
    %p40 = pneg %p34
    %p41 = scmp.eq.s32.totalorder %s11, 1
    %p42 = por %p40, %p41
    %p43 = scmp.ne.s32.totalorder %s35, %s38
    %p44 = scmp.eq.s32.totalorder %s11, 0
    %p45 = por %p43, %p44
    %p46 = scmp.ne.s32.totalorder %s35, %s38
    %p47 = scmp.eq.s32.totalorder %s16, 1
    %p48 = por %p46, %p47
    %p49 = scmp.ne.s32.totalorder %s38, %s39
    %p50 = scmp.eq.s32.totalorder %s16, 0
    %p51 = por %p49, %p50
    %p52 = scmp.ne.s32.totalorder %s38, %s39
    %p53 = scmp.eq.s32.totalorder %s17, 1
    %p54 = por %p52, %p53
    %p56 = scmp.ne.s32.totalorder %s39, %s55
    %p57 = scmp.eq.s32.totalorder %s17, 0
    %p58 = por %p56, %p57
    %s60 = sadd.s32 %s59, 1
    %p63 = scmp.eq.s32.totalorder %s11, 1
    %p64 = scmp.ne.s32.totalorder %s59, %s61
    %p65 = scmp.eq.s32.totalorder %s11, 0
    %p66 = por %p64, %p65
    %p67 = scmp.ne.s32.totalorder %s59, %s61
    %p68 = scmp.eq.s32.totalorder %s16, 1
    %p69 = por %p67, %p68
    %p70 = scmp.ne.s32.totalorder %s61, %s62
    %p71 = scmp.eq.s32.totalorder %s16, 0
    %p72 = por %p70, %p71
    %p73 = scmp.ne.s32.totalorder %s61, %s62
    %p74 = scmp.eq.s32.totalorder %s17, 1
    %p75 = por %p73, %p74
    %p77 = scmp.ne.s32.totalorder %s62, %s76
    %p78 = scmp.eq.s32.totalorder %s17, 0
    %p79 = por %p77, %p78
    %s81 = sadd.s32 %s80, 1
    %p84 = scmp.eq.s32.totalorder %s11, 1
    %p85 = scmp.ne.s32.totalorder %s80, %s82
    %p86 = scmp.eq.s32.totalorder %s11, 0
    %p87 = por %p85, %p86
    %p88 = scmp.ne.s32.totalorder %s80, %s82
    %p89 = scmp.eq.s32.totalorder %s16, 1
    %p90 = por %p88, %p89
    %p91 = scmp.ne.s32.totalorder %s82, %s83
    %p92 = scmp.eq.s32.totalorder %s16, 0
    %p93 = por %p91, %p92
    %p94 = scmp.ne.s32.totalorder %s82, %s83
    %p95 = scmp.eq.s32.totalorder %s17, 1
    %p96 = por %p94, %p95
    %p98 = scmp.ne.s32.totalorder %s83, %s97
    %p99 = scmp.eq.s32.totalorder %s17, 0
    %p100 = por %p98, %p99
    %s102 = sadd.s32 %s101, 1
    %p105 = scmp.eq.s32.totalorder %s11, 1
    %p106 = scmp.ne.s32.totalorder %s101, %s103
    %p107 = scmp.eq.s32.totalorder %s11, 0
    %p108 = por %p106, %p107
    %p109 = scmp.ne.s32.totalorder %s101, %s103
    %p110 = scmp.eq.s32.totalorder %s16, 1
    %p111 = por %p109, %p110
    %p112 = scmp.ne.s32.totalorder %s103, %s104
    %p113 = scmp.eq.s32.totalorder %s16, 0
    %p114 = por %p112, %p113
    %p115 = scmp.ne.s32.totalorder %s103, %s104
    %p116 = scmp.eq.s32.totalorder %s17, 1
    %p117 = por %p115, %p116
    %p119 = scmp.ne.s32.totalorder %s104, %s118
    %p120 = scmp.eq.s32.totalorder %s17, 0
    %p121 = por %p119, %p120
    %s123 = sadd.s32 %s122, 1
    %p126 = scmp.eq.s32.totalorder %s11, 1
    %p127 = scmp.ne.s32.totalorder %s122, %s124
    %p128 = scmp.eq.s32.totalorder %s11, 0
    %p129 = por %p127, %p128
    %p130 = scmp.ne.s32.totalorder %s122, %s124
    %p131 = scmp.eq.s32.totalorder %s16, 1
    %p132 = por %p130, %p131
    %p133 = scmp.ne.s32.totalorder %s124, %s125
    %p134 = scmp.eq.s32.totalorder %s16, 0
    %p135 = por %p133, %p134
    %p136 = scmp.ne.s32.totalorder %s124, %s125
    %p137 = scmp.eq.s32.totalorder %s17, 1
    %p138 = por %p136, %p137
    %p140 = scmp.ne.s32.totalorder %s125, %s139
    %p141 = scmp.eq.s32.totalorder %s17, 0
    %p142 = por %p140, %p141
    %s143 = ssub.s32 %s18, %s30
    %s144 = ssub.s32 %s19, %s26
    %s145 = sor.u32 %s143, %s144
    %p146 = scmp.eq.s32.totalorder %s145, 0
    %s148 = sadd.s32 %s147, 1
    %s149 = scalar_select %p146, %s147, %s148
    %p152 = pneg %p146
    %p153 = scmp.eq.s32.totalorder %s11, 1
    %p154 = por %p152, %p153
    %p155 = scmp.ne.s32.totalorder %s147, %s150
    %p156 = scmp.eq.s32.totalorder %s11, 0
    %p157 = por %p155, %p156
    %p158 = scmp.ne.s32.totalorder %s147, %s150
    %p159 = scmp.eq.s32.totalorder %s16, 1
    %p160 = por %p158, %p159
    %p161 = scmp.ne.s32.totalorder %s150, %s151
    %p162 = scmp.eq.s32.totalorder %s16, 0
    %p163 = por %p161, %p162
    %p164 = scmp.ne.s32.totalorder %s150, %s151
    %p165 = scmp.eq.s32.totalorder %s17, 1
    %p166 = por %p164, %p165
    %p168 = scmp.ne.s32.totalorder %s151, %s167
    %p169 = scmp.eq.s32.totalorder %s17, 0
    %p170 = por %p168, %p169
    %p171 = scmp.le.s32.totalorder 1, %s11
    %p172 = scmp.lt.s32.totalorder %s11, 3
    %p173 = pnand %p171, %p172
    %p174 = pneg %p173
    // Predicated region
    $region9: #{prenorm_pallas.1} parent=5 // pred_check
      _
    $region10: #{prenorm_pallas.1} parent=5 // pred_check_branch
      %176 = sbr.rel (%p173) target = $region12
    $region11: #{prenorm_pallas.1} parent=5 // pred_region
      %s177 = ssub.s32 %s11, 1
      // Predicated region
      $region13: #{prenorm_pallas.1} parent=11 // pred_check
        %p178 = pneg %p72
      $region14: #{prenorm_pallas.1} parent=11 // pred_check_branch
        %180 = sbr.rel (%p178) target = $region16
      $region15: #{prenorm_pallas.1} parent=11 // pred_region
        _
      $region16: #{prenorm_pallas.1} parent=11 // pred_fallthru
        _
      // Predicated region
      $region17: #{prenorm_pallas.1} parent=11 // pred_check
        %p181 = pneg %p93
      $region18: #{prenorm_pallas.1} parent=11 // pred_check_branch
        %183 = sbr.rel (%p181) target = $region20
      $region19: #{prenorm_pallas.1} parent=11 // pred_region
        _
      $region20: #{prenorm_pallas.1} parent=11 // pred_fallthru
        _
      // Predicated region
      $region21: #{prenorm_pallas.1} parent=11 // pred_check
        %p184 = pneg %p114
      $region22: #{prenorm_pallas.1} parent=11 // pred_check_branch
        %186 = sbr.rel (%p184) target = $region24
      $region23: #{prenorm_pallas.1} parent=11 // pred_region
        _
      $region24: #{prenorm_pallas.1} parent=11 // pred_fallthru
        _
      // Predicated region
      $region25: #{prenorm_pallas.1} parent=11 // pred_check
        %p187 = pneg %p135
      $region26: #{prenorm_pallas.1} parent=11 // pred_check_branch
        %189 = sbr.rel (%p187) target = $region28
      $region27: #{prenorm_pallas.1} parent=11 // pred_region
        _
      $region28: #{prenorm_pallas.1} parent=11 // pred_fallthru
        _
    $region12: #{prenorm_pallas.1} parent=5 // pred_fallthru
      _
    %p190 = scmp.lt.s32.totalorder %s11, 2
    // Predicated region
    $region29: #{prenorm_pallas.1} parent=5 // pred_check
      %p191 = pneg %p190
    $region30: #{prenorm_pallas.1} parent=5 // pred_check_branch
      %193 = sbr.rel (%p191) target = $region32
    $region31: #{prenorm_pallas.1} parent=5 // pred_region
      // Predicated region
      $region33: #{prenorm_pallas.1} parent=31 // pred_check
        %p194 = pneg %p45
      $region34: #{prenorm_pallas.1} parent=31 // pred_check_branch
        %196 = sbr.rel (%p194) target = $region36
      $region35: #{prenorm_pallas.1} parent=31 // pred_region
        %s197 = smul.u32 2, %s19
        %p198 = scmp.lt.s32.totalorder %s18, 1
        %s199 = scalar_select %p198, %s18, 1
        %p200 = scmp.lt.s32.totalorder %s197, 1
        %s201 = scalar_select %p200, %s197, 1
        %s202 = smul.addr %s199, 2
        %s203 = sadd.s32 %s201, %s202
        %s204 = smul.addr %s203, 4
        %s205 = scalar_lea.vmem %s0, %s204
        %s206 = smul.u32 2, %s19
      $region36: #{prenorm_pallas.1} parent=31 // pred_fallthru
        _
    $region32: #{prenorm_pallas.1} parent=5 // pred_fallthru
      _
    %p207 = scmp.le.s32.totalorder 1, %s11
    %p208 = scmp.lt.s32.totalorder %s11, 3
    %p209 = pnand %p207, %p208
    %p210 = pneg %p209
    // Predicated region
    $region37: #{prenorm_pallas.1} parent=5 // pred_check
      _
    $region38: #{prenorm_pallas.1} parent=5 // pred_check_branch
      %212 = sbr.rel (%p209) target = $region40
    $region39: #{prenorm_pallas.1} parent=5 // pred_region
      %s213 = ssub.s32 %s11, 1
      %s214 = smul.u32 2, %s21
      %p215 = scmp.lt.s32.totalorder %s20, 1
      %s216 = scalar_select %p215, %s20, 1
      %p217 = scmp.lt.s32.totalorder %s214, 1
      %s218 = scalar_select %p217, %s214, 1
      %s219 = smul.addr %s216, 2
      %s220 = sadd.s32 %s218, %s219
      %s221 = smul.addr %s220, 4
      %s222 = scalar_lea.vmem %s0, %s221
      %p223 = pneg %p51
      %p224 = pneg %p48
      %p225 = pneg %p72
      %p226 = pneg %p69
      %p227 = pneg %p93
      %p228 = pneg %p90
      %p229 = pneg %p114
      %p230 = pneg %p111
      %p231 = pneg %p135
      %p232 = pneg %p132
      %p233 = pneg %p163
      %p234 = pneg %p160
      %s235 = smul.u32 2, %s21
      %p236 = scmp.lt.s32.totalorder %s20, 1
      %s237 = scalar_select %p236, %s20, 1
      %p238 = scmp.lt.s32.totalorder %s235, 1
      %s239 = scalar_select %p238, %s235, 1
      %s240 = smul.addr %s237, 2
      %s241 = sadd.s32 %s239, %s240
      %s242 = smul.addr %s241, 4
      %s243 = scalar_lea.vmem %s5, %s242
      %s244 = smul.u32 2, %s21
      %p245 = scmp.lt.s32.totalorder %s20, 1
      %s246 = scalar_select %p245, %s20, 1
      %p247 = scmp.lt.s32.totalorder %s244, 1
      %s248 = scalar_select %p247, %s244, 1
      %s249 = smul.addr %s246, 2
      %s250 = sadd.s32 %s248, %s249
      %s251 = smul.addr %s250, 4
      %s252 = scalar_lea.vmem %s0, %s251
      %s253 = smul.u32 2, %s21
      %s254 = smul.u32 2, %s21
      %p255 = scmp.lt.s32.totalorder %s20, 1
      %s256 = scalar_select %p255, %s20, 1
      %p257 = scmp.lt.s32.totalorder %s254, 1
      %s258 = scalar_select %p257, %s254, 1
      %s259 = smul.addr %s256, 2
      %s260 = sadd.s32 %s258, %s259
      %s261 = smul.addr %s260, 4
      %s262 = scalar_lea.vmem %s5, %s261
      %s263 = smul.u32 2, %s21
      %v264 = vld [vmem:[%s252] sm:$0xff]
      %v266 = vrot.slane %v264, 5
      %v267 = vrot.slane %v266, 4
      %v269 = vadd.f32 %v264, %v267
      %v270 = vrot.slane %v264, 6
      %v271 = vrot.slane %v270, 4
      %v273 = vadd.f32 %v269, %v271
      %v274 = vrot.slane %v264, 7
      %v275 = vrot.slane %v274, 4
      %v277 = vadd.f32 %v273, %v275
      %v278 = vmul.f32 %v277, 0.25
      %v280 = vperm.slane %v278, 0
      %v281 = vperm.slane %v278, 4
      %v284 = vperm.slane %v280, 0
      %v285 = vperm.slane %v281, 0
      %v288 = vrot.slane %v285, 4
      %vm289 = vcmask 1043456
      %v290 = vsel %vm289, %v284, %v288
      %v292 = vsub.f32 %v264, %v290
      %v293 = vmul.f32 %v292, %v292
      %v295 = vrot.slane %v293, 5
      %v296 = vrot.slane %v295, 4
      %v298 = vadd.f32 %v293, %v296
      %v299 = vrot.slane %v293, 6
      %v300 = vrot.slane %v299, 4
      %v302 = vadd.f32 %v298, %v300
      %v303 = vrot.slane %v293, 7
      %v304 = vrot.slane %v303, 4
      %v306 = vadd.f32 %v302, %v304
      %v307 = vmul.f32 %v306, 0.25
      %v308 = vrsqrt.pop %v307
      %v309 = vmul.f32 %v308, %v307
      %v310 = vmul.f32 %v309, %v308
      %v311 = vmul.f32 0.5, %v310
      %v312 = vsub.f32 1.5, %v311
      %v313 = vmul.f32 %v308, %v312
      %v314 = vmul.f32 %v307, %v313
      %vm315 = vcmp.eq.f32.partialorder %v307, inf
      %v316 = vsel %vm315, %v307, %v314
      %vm317 = vcmp.eq.f32.partialorder %v307, 0.0
      %v318 = vand.u32 %v307, 2147483648
      %v319 = vsel %vm317, %v318, %v316
      %v320 = vadd.f32 %v319, 1e-05
      %v321 = vrcp.pop %v320
      %v323 = vperm.slane %v321, 0
      %v324 = vperm.slane %v321, 4
      %v327 = vperm.slane %v323, 0
      %v328 = vperm.slane %v324, 0
      %v331 = vrot.slane %v328, 4
      %v332 = vsel %vm289, %v327, %v331
      %v334 = vmul.f32 %v292, %v332
      %v335 = vld [vmem:[%s1] sm:$0xf]
      %337 = vset.pattern.permute.xlu0 0
      %338 = vperm.xlu0 %337, %v335
      %v339 = vpop.permute.xlu0 %338
      %v341 = vunpack.c.l.s4 839922192
      %v342 = vunpack.c.0.s8 %v341
      %v343 = vperm.slane %v339, %v342
      %v345 = vmul.f32 %v334, %v343
      %v346 = vld [vmem:[%s2] sm:$0xf]
      %348 = vset.pattern.permute.xlu0 0
      %349 = vperm.xlu0 %348, %v346
      %v350 = vpop.permute.xlu0 %349
      %v352 = vunpack.c.l.s4 839922192
      %v353 = vunpack.c.0.s8 %v352
      %v354 = vperm.slane %v350, %v353
      %v356 = vadd.f32 %v345, %v354
      %v357 = vld [vmem:[%s3] sm:$0xf]
      %359 = vset.pattern.permute.xlu0 0
      %360 = vperm.xlu0 %359, %v357
      %v361 = vpop.permute.xlu0 %360
      %v364 = vperm.slane %v356, 0
      %v365 = vperm.slane %v356, 4
      %v368 = vperm.slane %v364, 0
      %v369 = vperm.slane %v365, 0
      %v370 = vmul.f32 %v361, %v368
      %v371 = vmul.f32 %v361, %v369
      %372 = vset.pattern.permute.xlu0 1
      %373 = vperm.xlu0 %372, %v357
      %v374 = vpop.permute.xlu0 %373
      %v376 = vperm.slane %v356, 1
      %v377 = vperm.slane %v356, 5
      %v380 = vperm.slane %v376, 1
      %v381 = vperm.slane %v377, 1
      %v382 = vmul.f32 %v374, %v380
      %v383 = vmul.f32 %v374, %v381
      %v384 = vadd.f32 %v370, %v382
      %v385 = vadd.f32 %v371, %v383
      %386 = vset.pattern.permute.xlu0 2
      %387 = vperm.xlu0 %386, %v357
      %v388 = vpop.permute.xlu0 %387
      %v390 = vperm.slane %v356, 2
      %v391 = vperm.slane %v356, 6
      %v394 = vperm.slane %v390, 2
      %v395 = vperm.slane %v391, 2
      %v396 = vmul.f32 %v388, %v394
      %v397 = vmul.f32 %v388, %v395
      %v398 = vadd.f32 %v384, %v396
      %v399 = vadd.f32 %v385, %v397
      %400 = vset.pattern.permute.xlu0 3
      %401 = vperm.xlu0 %400, %v357
      %v402 = vpop.permute.xlu0 %401
      %v404 = vperm.slane %v356, 3
      %v405 = vperm.slane %v356, 7
      %v408 = vperm.slane %v404, 3
      %v409 = vperm.slane %v405, 3
      %v410 = vmul.f32 %v402, %v408
      %v411 = vmul.f32 %v402, %v409
      %v412 = vadd.f32 %v398, %v410
      %v413 = vadd.f32 %v399, %v411
      %v414 = vld [vmem:[%s4] sm:$0xf]
      %416 = vset.pattern.permute.xlu0 0
      %417 = vperm.xlu0 %416, %v414
      %v418 = vpop.permute.xlu0 %417
      %v420 = vadd.f32 %v412, %v418
      %v421 = vadd.f32 %v413, %v418
      %v424 = vrot.slane %v421, 4
      %v425 = vsel %vm289, %v420, %v424
      %427 = vst [vmem:[%s262] sm:$0xff] %v425
      %s428 = smul.u32 2, %s21
      %p429 = scmp.lt.s32.totalorder %s20, 1
      %s430 = scalar_select %p429, %s20, 1
      %p431 = scmp.lt.s32.totalorder %s428, 1
      %s432 = scalar_select %p431, %s428, 1
      %s433 = smul.addr %s430, 2
      %s434 = sadd.s32 %s432, %s433
      %s435 = smul.addr %s434, 4
      %s436 = scalar_lea.vmem %s5, %s435
      // Predicated region
      $region41: #{prenorm_pallas.1} parent=39 // pred_check
        %p437 = pneg %p160
      $region42: #{prenorm_pallas.1} parent=39 // pred_check_branch
        %439 = sbr.rel (%p437) target = $region44
      $region43: #{prenorm_pallas.1} parent=39 // pred_region
        %s440 = smul.u32 2, %s21
      $region44: #{prenorm_pallas.1} parent=39 // pred_fallthru
        _
    $region40: #{prenorm_pallas.1} parent=5 // pred_fallthru
      _
    %p441 = scmp.le.s32.totalorder 2, %s11
    // Predicated region
    $region45: #{prenorm_pallas.1} parent=5 // pred_check
      %p442 = pneg %p441
    $region46: #{prenorm_pallas.1} parent=5 // pred_check_branch
      %444 = sbr.rel (%p442) target = $region48
    $region47: #{prenorm_pallas.1} parent=5 // pred_region
      %s445 = ssub.s32 %s11, 2
      // Predicated region
      $region49: #{prenorm_pallas.1} parent=47 // pred_check
        %p446 = pneg %p166
      $region50: #{prenorm_pallas.1} parent=47 // pred_check_branch
        %448 = sbr.rel (%p446) target = $region52
      $region51: #{prenorm_pallas.1} parent=47 // pred_region
        %s449 = smul.u32 2, %s23
        %p450 = scmp.lt.s32.totalorder %s22, 1
        %s451 = scalar_select %p450, %s22, 1
        %p452 = scmp.lt.s32.totalorder %s449, 1
        %s453 = scalar_select %p452, %s449, 1
        %s454 = smul.addr %s451, 2
        %s455 = sadd.s32 %s453, %s454
        %s456 = smul.addr %s455, 4
        %s457 = scalar_lea.vmem %s5, %s456
      $region52: #{prenorm_pallas.1} parent=47 // pred_fallthru
        _
    $region48: #{prenorm_pallas.1} parent=5 // pred_fallthru
      _
  $region6: #{prenorm_pallas.1} parent=0 // loop_footer
    %s15 = sadd.s32 1, %s11
  $region7: #{prenorm_pallas.1} parent=0 // loop_footer_branch
    %10 = sbr.rel target = $region3
  $region8: #{prenorm_pallas.1} parent=0 // loop_exit
    _

</llo_original>
